<compile_context>
chip_gen: v5e
topology: v5e:2x2
jax: 0.10.0
libtpu: 0.0.40
codegen_flags: <defaults>
</compile_context>

<pallas_src>
import jax
import jax.numpy as jnp
from jax.experimental import pallas as pl
from jax.experimental.pallas import tpu as pltpu

SELU_ALPHA = 1.6732632423543772
SELU_SCALE = 1.0507009873554805


def _selu(x):
    return SELU_SCALE * jnp.where(x > 0, x, SELU_ALPHA * (jnp.exp(x) - 1.0))


def _round_up(x, m):
    return ((x + m - 1) // m) * m


def npp_kernel(mmax_ref, mmin_ref, x_ref,
               w0_ref, b0_ref, w1_ref, b1_ref, w2_ref, b2_ref,
               scale_ref, o_ref):
    x = x_ref[...]                                   # (bb, inD)
    M = mmax_ref[...]                                # (1, 1) -> broadcast
    m = mmin_ref[...]                                # (1, 1) -> broadcast

    # Global (whole-tensor) min / max normalization to [-1, 1].
    # TODO(synk): if all elements of x are equal, (M - m) == 0 -> NaN/Inf,
    # identical behavior to the PyTorch module (no guard there either).
    xn = 2.0 * (x - m) / (M - m) - 1.0

    # Piecewise log warp.
    fl = (xn < 0).astype(jnp.float32)
    fr = 1.0 - fl
    eps = 0.01
    xl = (jnp.log((xn + 1.0 + eps) * fl + fr)
          - jnp.log((1.0 - xn + eps) * fr + fl))

    # Layer 0: Linear(inD -> Dp) + SELU   (K=2: mostly VPU-ish cost, fine)
    h = jnp.dot(xl, w0_ref[...], preferred_element_type=jnp.float32) + b0_ref[...]
    h = _selu(h)

    # Layer 1: Linear(Dp -> Dp) + SELU    (the one real [bb,128]x[128,128] pass)
    h = jnp.dot(h, w1_ref[...], preferred_element_type=jnp.float32) + b1_ref[...]
    h = _selu(h)

    # Layer 2: Linear(Dp -> outDp) + tanh (lane-dense padded output)
    y = jnp.dot(h, w2_ref[...], preferred_element_type=jnp.float32) + b2_ref[...]
    y = jnp.tanh(y)

    # torch.cat([y[:, :inD] * max_d, y[:, inD:]], -1) via precomputed row scale.
    o_ref[...] = y * scale_ref[...]


def init_npp_params(key, inD=2, D=100, outD=None):
    """Deterministic parameter init mirroring NPP.__init__ with init_mode='eye'.

    Weights stored transposed vs. PyTorch: (in_features, out_features)."""
    if outD is None:
        outD = inD
    k0, k1, k2, k3 = jax.random.split(key, 4)

    # Layer 0: torch weight = eye(inD).repeat(D//inD, 1) -> (D, inD); here (inD, D).
    w0 = jnp.tile(jnp.eye(inD, dtype=jnp.float32), (1, D // inD))
    b0 = jax.random.uniform(k0, (1, D), jnp.float32,
                            minval=-1.0 / jnp.sqrt(inD), maxval=1.0 / jnp.sqrt(inD))

    # Layer 1: torch weight = eye(D).
    w1 = jnp.eye(D, dtype=jnp.float32)
    b1 = jax.random.uniform(k1, (1, D), jnp.float32,
                            minval=-1.0 / jnp.sqrt(D), maxval=1.0 / jnp.sqrt(D))

    # Layer 2: default (kaiming-uniform-like) init, deterministic via PRNGKey.
    bound = 1.0 / jnp.sqrt(D)
    w2 = jax.random.uniform(k2, (D, outD), jnp.float32, minval=-bound, maxval=bound)
    b2 = jax.random.uniform(k3, (1, outD), jnp.float32, minval=-bound, maxval=bound)

    return (w0, b0, w1, b1, w2, b2)


def pad_npp_params(params, *, inD, max_d, Dp=128, outDp=128):
    """Zero-pad hidden/output dims to lane-dense widths; build the column-scale row.

    Zero padding is exact: SELU(0)=0 keeps padded hidden columns inert and
    padded output columns are tanh(0)=0 and get sliced off."""
    w0, b0, w1, b1, w2, b2 = params
    D = w0.shape[1]
    outD = w2.shape[1]
    assert Dp >= D and outDp >= outD

    w0p = jnp.pad(w0, ((0, 0), (0, Dp - D)))
    b0p = jnp.pad(b0, ((0, 0), (0, Dp - D)))
    w1p = jnp.pad(w1, ((0, Dp - D), (0, Dp - D)))
    b1p = jnp.pad(b1, ((0, 0), (0, Dp - D)))
    w2p = jnp.pad(w2, ((0, Dp - D), (0, outDp - outD)))
    b2p = jnp.pad(b2, ((0, 0), (0, outDp - outD)))

    col = jnp.arange(outDp)
    scale = jnp.where(col < inD, jnp.float32(max_d),
                      jnp.float32(1.0)).astype(jnp.float32).reshape(1, outDp)
    return (w0p, b0p, w1p, b1p, w2p, b2p, scale), outD


def npp_forward(x, padded_params, *, outD, block_b=512):
    """Run the NPP forward. `padded_params` from pad_npp_params."""
    w0, b0, w1, b1, w2, b2, scale = padded_params
    B, inD = x.shape
    Dp = w1.shape[0]
    outDp = w2.shape[1]

    x = x.astype(jnp.float32)
    # Global min/max hoisted out of the kernel (must see the whole tensor).
    M = jnp.max(x).reshape(1, 1)
    m = jnp.min(x).reshape(1, 1)

    # Batch tiling: block rows multiple of 8; pad batch (edge-replicated rows,
    # sliced off afterwards) so the grid divides evenly.
    bb = min(block_b, _round_up(B, 8))
    Bp = _round_up(B, bb)
    xp = x if Bp == B else jnp.pad(x, ((0, Bp - B), (0, 0)), mode="edge")

    grid = (Bp // bb,)

    out = pl.pallas_call(
        npp_kernel,
        out_shape=jax.ShapeDtypeStruct((Bp, outDp), jnp.float32),
        grid=grid,
        in_specs=[
            pl.BlockSpec((1, 1), lambda i: (0, 0)),          # M
            pl.BlockSpec((1, 1), lambda i: (0, 0)),          # m
            pl.BlockSpec((bb, inD), lambda i: (i, 0)),       # x (batch-tiled)
            pl.BlockSpec(w0.shape, lambda i: (0, 0)),        # weights stay VMEM-resident
            pl.BlockSpec(b0.shape, lambda i: (0, 0)),
            pl.BlockSpec(w1.shape, lambda i: (0, 0)),
            pl.BlockSpec(b1.shape, lambda i: (0, 0)),
            pl.BlockSpec(w2.shape, lambda i: (0, 0)),
            pl.BlockSpec(b2.shape, lambda i: (0, 0)),
            pl.BlockSpec(scale.shape, lambda i: (0, 0)),
        ],
        out_specs=pl.BlockSpec((bb, outDp), lambda i: (i, 0)),
        compiler_params=pltpu.CompilerParams(
            dimension_semantics=("parallel",)),              # megacore batch split
    )(M, m, xp, w0, b0, w1, b1, w2, b2, scale)

    return out[:B, :outD]


def npp_reference(x, params, *, inD=2, max_d=1.0):
    """Pure-JAX reference of the PyTorch forward, for validation."""
    w0, b0, w1, b1, w2, b2 = params
    M = jnp.max(x)
    m = jnp.min(x)
    xn = 2.0 * (x - m) / (M - m) - 1.0
    fl = (xn < 0).astype(jnp.float32)
    fr = 1.0 - fl
    eps = 0.01
    h = jnp.log((xn + 1.0 + eps) * fl + fr) - jnp.log((1.0 - xn + eps) * fr + fl)
    h = _selu(h @ w0 + b0)
    h = _selu(h @ w1 + b1)
    y = jnp.tanh(h @ w2 + b2)
    return jnp.concatenate([y[:, :inD] * max_d, y[:, inD:]], axis=-1)


if __name__ == "__main__":
    inD, D, outD = 2, 100, 2
    B = 16
    max_d = 1.0

    key = jax.random.PRNGKey(0)
    kx, kp = jax.random.split(key)
    x = jax.random.normal(kx, (B, inD), dtype=jnp.float32) * 3.0
    params = init_npp_params(kp, inD=inD, D=D, outD=outD)

    padded_params, outD_real = pad_npp_params(params, inD=inD, max_d=max_d)

    out = npp_forward(x, padded_params, outD=outD_real)
    out = jax.block_until_ready(out)

    ref = npp_reference(x, params, inD=inD, max_d=max_d)
    assert out.shape == (B, outD)
    assert jnp.allclose(out, ref, atol=1e-4, rtol=1e-4), "mismatch vs reference"

    print("KERNEL_OK")
</pallas_src>

<mosaic_0001>
module attributes {stable_mosaic.version = 11 : i64} {
  func.func @npp_kernel(%arg0: i32, %arg1: memref<1x1xf32, #tpu.memory_space<vmem>>, %arg2: memref<1x1xf32, #tpu.memory_space<vmem>>, %arg3: memref<16x2xf32, #tpu.memory_space<vmem>>, %arg4: memref<2x128xf32, #tpu.memory_space<vmem>>, %arg5: memref<1x128xf32, #tpu.memory_space<vmem>>, %arg6: memref<128x128xf32, #tpu.memory_space<vmem>>, %arg7: memref<1x128xf32, #tpu.memory_space<vmem>>, %arg8: memref<128x128xf32, #tpu.memory_space<vmem>>, %arg9: memref<1x128xf32, #tpu.memory_space<vmem>>, %arg10: memref<1x128xf32, #tpu.memory_space<vmem>>, %arg11: memref<16x128xf32, #tpu.memory_space<vmem>>) attributes {dimension_semantics = [#tpu.dimension_semantics<parallel>], iteration_bounds = array<i64: 1>, scalar_prefetch = 0 : i64, scratch_operands = 0 : i64, tpu.core_type = #tpu.core_type<tc>, window_params = [{pipeline_mode = #tpu.pipeline_mode<synchronous>, transform_indices = @transform_0, window_bounds = array<i64: 1, 1>}, {pipeline_mode = #tpu.pipeline_mode<synchronous>, transform_indices = @transform_1, window_bounds = array<i64: 1, 1>}, {transform_indices = @transform_2, window_bounds = array<i64: 16, 2>}, {pipeline_mode = #tpu.pipeline_mode<synchronous>, transform_indices = @transform_3, window_bounds = array<i64: 2, 128>}, {pipeline_mode = #tpu.pipeline_mode<synchronous>, transform_indices = @transform_4, window_bounds = array<i64: 1, 128>}, {pipeline_mode = #tpu.pipeline_mode<synchronous>, transform_indices = @transform_5, window_bounds = array<i64: 128, 128>}, {pipeline_mode = #tpu.pipeline_mode<synchronous>, transform_indices = @transform_6, window_bounds = array<i64: 1, 128>}, {pipeline_mode = #tpu.pipeline_mode<synchronous>, transform_indices = @transform_7, window_bounds = array<i64: 128, 128>}, {pipeline_mode = #tpu.pipeline_mode<synchronous>, transform_indices = @transform_8, window_bounds = array<i64: 1, 128>}, {pipeline_mode = #tpu.pipeline_mode<synchronous>, transform_indices = @transform_9, window_bounds = array<i64: 1, 128>}, {transform_indices = @transform_10, window_bounds = array<i64: 16, 128>}]} {
    %c0 = arith.constant 0 : index
    %c0_0 = arith.constant 0 : index
    %0 = vector.load %arg3[%c0, %c0_0] : memref<16x2xf32, #tpu.memory_space<vmem>>, vector<16x2xf32>
    %c0_1 = arith.constant 0 : index
    %c0_2 = arith.constant 0 : index
    %1 = vector.load %arg1[%c0_1, %c0_2] : memref<1x1xf32, #tpu.memory_space<vmem>>, vector<1x1xf32>
    %c0_3 = arith.constant 0 : index
    %c0_4 = arith.constant 0 : index
    %2 = vector.load %arg2[%c0_3, %c0_4] : memref<1x1xf32, #tpu.memory_space<vmem>>, vector<1x1xf32>
    %3 = vector.broadcast %2 : vector<1x1xf32> to vector<16x2xf32>
    %4 = arith.subf %0, %3 : vector<16x2xf32>
    %cst = arith.constant 2.000000e+00 : f32
    %5 = vector.broadcast %cst : f32 to vector<16x2xf32>
    %6 = arith.mulf %5, %4 : vector<16x2xf32>
    %7 = arith.subf %1, %2 : vector<1x1xf32>
    %8 = vector.broadcast %7 : vector<1x1xf32> to vector<16x2xf32>
    %9 = arith.divf %6, %8 : vector<16x2xf32>
    %cst_5 = arith.constant 1.000000e+00 : f32
    %10 = vector.broadcast %cst_5 : f32 to vector<16x2xf32>
    %11 = arith.subf %9, %10 : vector<16x2xf32>
    %cst_6 = arith.constant 0.000000e+00 : f32
    %12 = vector.broadcast %cst_6 : f32 to vector<16x2xf32>
    %13 = arith.cmpf olt, %11, %12 : vector<16x2xf32>
    %14 = arith.extui %13 : vector<16x2xi1> to vector<16x2xi32>
    %15 = arith.sitofp %14 : vector<16x2xi32> to vector<16x2xf32>
    %cst_7 = arith.constant 1.000000e+00 : f32
    %16 = vector.broadcast %cst_7 : f32 to vector<16x2xf32>
    %17 = arith.subf %16, %15 : vector<16x2xf32>
    %cst_8 = arith.constant 1.000000e+00 : f32
    %18 = vector.broadcast %cst_8 : f32 to vector<16x2xf32>
    %19 = arith.addf %11, %18 : vector<16x2xf32>
    %cst_9 = arith.constant 0.00999999977 : f32
    %20 = vector.broadcast %cst_9 : f32 to vector<16x2xf32>
    %21 = arith.addf %19, %20 : vector<16x2xf32>
    %22 = arith.mulf %21, %15 : vector<16x2xf32>
    %23 = arith.addf %22, %17 : vector<16x2xf32>
    %24 = math.log %23 : vector<16x2xf32>
    %cst_10 = arith.constant 1.000000e+00 : f32
    %25 = vector.broadcast %cst_10 : f32 to vector<16x2xf32>
    %26 = arith.subf %25, %11 : vector<16x2xf32>
    %cst_11 = arith.constant 0.00999999977 : f32
    %27 = vector.broadcast %cst_11 : f32 to vector<16x2xf32>
    %28 = arith.addf %26, %27 : vector<16x2xf32>
    %29 = arith.mulf %28, %17 : vector<16x2xf32>
    %30 = arith.addf %29, %15 : vector<16x2xf32>
    %31 = math.log %30 : vector<16x2xf32>
    %32 = arith.subf %24, %31 : vector<16x2xf32>
    %c0_12 = arith.constant 0 : index
    %c0_13 = arith.constant 0 : index
    %33 = vector.load %arg4[%c0_12, %c0_13] : memref<2x128xf32, #tpu.memory_space<vmem>>, vector<2x128xf32>
    %cst_14 = arith.constant dense<0.000000e+00> : vector<16x128xf32>
    %34 = tpu.matmul %32, %33, %cst_14 {dimension_numbers = #tpu.dot_dimension_numbers<[1], [0], [0], [1], [0, 0, 1, 1], [], []>} : vector<16x2xf32>, vector<2x128xf32>, vector<16x128xf32> -> vector<16x128xf32>
    %c0_15 = arith.constant 0 : index
    %c0_16 = arith.constant 0 : index
    %35 = vector.load %arg5[%c0_15, %c0_16] : memref<1x128xf32, #tpu.memory_space<vmem>>, vector<1x128xf32>
    %36 = vector.broadcast %35 : vector<1x128xf32> to vector<16x128xf32>
    %37 = arith.addf %34, %36 : vector<16x128xf32>
    %cst_17 = arith.constant 0.000000e+00 : f32
    %38 = vector.broadcast %cst_17 : f32 to vector<16x128xf32>
    %39 = arith.cmpf ogt, %37, %38 : vector<16x128xf32>
    %40 = math.exp %37 : vector<16x128xf32>
    %cst_18 = arith.constant 1.000000e+00 : f32
    %41 = vector.broadcast %cst_18 : f32 to vector<16x128xf32>
    %42 = arith.subf %40, %41 : vector<16x128xf32>
    %cst_19 = arith.constant 1.67326319 : f32
    %43 = vector.broadcast %cst_19 : f32 to vector<16x128xf32>
    %44 = arith.mulf %43, %42 : vector<16x128xf32>
    %45 = arith.select %39, %37, %44 : vector<16x128xi1>, vector<16x128xf32>
    %cst_20 = arith.constant 1.05070102 : f32
    %46 = vector.broadcast %cst_20 : f32 to vector<16x128xf32>
    %47 = arith.mulf %46, %45 : vector<16x128xf32>
    %c0_21 = arith.constant 0 : index
    %c0_22 = arith.constant 0 : index
    %48 = vector.load %arg6[%c0_21, %c0_22] : memref<128x128xf32, #tpu.memory_space<vmem>>, vector<128x128xf32>
    %cst_23 = arith.constant dense<0.000000e+00> : vector<16x128xf32>
    %49 = tpu.matmul %47, %48, %cst_23 {dimension_numbers = #tpu.dot_dimension_numbers<[1], [0], [0], [1], [0, 0, 1, 1], [], []>} : vector<16x128xf32>, vector<128x128xf32>, vector<16x128xf32> -> vector<16x128xf32>
    %c0_24 = arith.constant 0 : index
    %c0_25 = arith.constant 0 : index
    %50 = vector.load %arg7[%c0_24, %c0_25] : memref<1x128xf32, #tpu.memory_space<vmem>>, vector<1x128xf32>
    %51 = vector.broadcast %50 : vector<1x128xf32> to vector<16x128xf32>
    %52 = arith.addf %49, %51 : vector<16x128xf32>
    %cst_26 = arith.constant 0.000000e+00 : f32
    %53 = vector.broadcast %cst_26 : f32 to vector<16x128xf32>
    %54 = arith.cmpf ogt, %52, %53 : vector<16x128xf32>
    %55 = math.exp %52 : vector<16x128xf32>
    %cst_27 = arith.constant 1.000000e+00 : f32
    %56 = vector.broadcast %cst_27 : f32 to vector<16x128xf32>
    %57 = arith.subf %55, %56 : vector<16x128xf32>
    %cst_28 = arith.constant 1.67326319 : f32
    %58 = vector.broadcast %cst_28 : f32 to vector<16x128xf32>
    %59 = arith.mulf %58, %57 : vector<16x128xf32>
    %60 = arith.select %54, %52, %59 : vector<16x128xi1>, vector<16x128xf32>
    %cst_29 = arith.constant 1.05070102 : f32
    %61 = vector.broadcast %cst_29 : f32 to vector<16x128xf32>
    %62 = arith.mulf %61, %60 : vector<16x128xf32>
    %c0_30 = arith.constant 0 : index
    %c0_31 = arith.constant 0 : index
    %63 = vector.load %arg8[%c0_30, %c0_31] : memref<128x128xf32, #tpu.memory_space<vmem>>, vector<128x128xf32>
    %cst_32 = arith.constant dense<0.000000e+00> : vector<16x128xf32>
    %64 = tpu.matmul %62, %63, %cst_32 {dimension_numbers = #tpu.dot_dimension_numbers<[1], [0], [0], [1], [0, 0, 1, 1], [], []>} : vector<16x128xf32>, vector<128x128xf32>, vector<16x128xf32> -> vector<16x128xf32>
    %c0_33 = arith.constant 0 : index
    %c0_34 = arith.constant 0 : index
    %65 = vector.load %arg9[%c0_33, %c0_34] : memref<1x128xf32, #tpu.memory_space<vmem>>, vector<1x128xf32>
    %66 = vector.broadcast %65 : vector<1x128xf32> to vector<16x128xf32>
    %67 = arith.addf %64, %66 : vector<16x128xf32>
    %68 = math.tanh %67 : vector<16x128xf32>
    %c0_35 = arith.constant 0 : index
    %c0_36 = arith.constant 0 : index
    %69 = vector.load %arg10[%c0_35, %c0_36] : memref<1x128xf32, #tpu.memory_space<vmem>>, vector<1x128xf32>
    %70 = vector.broadcast %69 : vector<1x128xf32> to vector<16x128xf32>
    %71 = arith.mulf %68, %70 : vector<16x128xf32>
    %c0_37 = arith.constant 0 : index
    %c0_38 = arith.constant 0 : index
    %72 = vector.load %arg11[%c0_37, %c0_38] : memref<16x128xf32, #tpu.memory_space<vmem>>, vector<16x128xf32>
    tpu.vector_store %arg11[%c0_37, %c0_38], %71 {strides = array<i32>} : memref<16x128xf32, #tpu.memory_space<vmem>>, vector<16x128xf32>,
    return
  }
  func.func @transform_0(%arg0: i32) -> (i32, i32) {
    %c0_i32 = arith.constant 0 : i32
    %c0_i32_0 = arith.constant 0 : i32
    %c0_i32_1 = arith.constant 0 : i32
    return %c0_i32, %c0_i32_0 : i32, i32
  }
  func.func @transform_1(%arg0: i32) -> (i32, i32) {
    %c0_i32 = arith.constant 0 : i32
    %c0_i32_0 = arith.constant 0 : i32
    %c0_i32_1 = arith.constant 0 : i32
    return %c0_i32, %c0_i32_0 : i32, i32
  }
  func.func @transform_2(%arg0: i32) -> (i32, i32) {
    %c0_i32 = arith.constant 0 : i32
    %c0_i32_0 = arith.constant 0 : i32
    return %arg0, %c0_i32 : i32, i32
  }
  func.func @transform_3(%arg0: i32) -> (i32, i32) {
    %c0_i32 = arith.constant 0 : i32
    %c0_i32_0 = arith.constant 0 : i32
    %c0_i32_1 = arith.constant 0 : i32
    return %c0_i32, %c0_i32_0 : i32, i32
  }
  func.func @transform_4(%arg0: i32) -> (i32, i32) {
    %c0_i32 = arith.constant 0 : i32
    %c0_i32_0 = arith.constant 0 : i32
    %c0_i32_1 = arith.constant 0 : i32
    return %c0_i32, %c0_i32_0 : i32, i32
  }
  func.func @transform_5(%arg0: i32) -> (i32, i32) {
    %c0_i32 = arith.constant 0 : i32
    %c0_i32_0 = arith.constant 0 : i32
    %c0_i32_1 = arith.constant 0 : i32
    return %c0_i32, %c0_i32_0 : i32, i32
  }
  func.func @transform_6(%arg0: i32) -> (i32, i32) {
    %c0_i32 = arith.constant 0 : i32
    %c0_i32_0 = arith.constant 0 : i32
    %c0_i32_1 = arith.constant 0 : i32
    return %c0_i32, %c0_i32_0 : i32, i32
  }
  func.func @transform_7(%arg0: i32) -> (i32, i32) {
    %c0_i32 = arith.constant 0 : i32
    %c0_i32_0 = arith.constant 0 : i32
    %c0_i32_1 = arith.constant 0 : i32
    return %c0_i32, %c0_i32_0 : i32, i32
  }
  func.func @transform_8(%arg0: i32) -> (i32, i32) {
    %c0_i32 = arith.constant 0 : i32
    %c0_i32_0 = arith.constant 0 : i32
    %c0_i32_1 = arith.constant 0 : i32
    return %c0_i32, %c0_i32_0 : i32, i32
  }
  func.func @transform_9(%arg0: i32) -> (i32, i32) {
    %c0_i32 = arith.constant 0 : i32
    %c0_i32_0 = arith.constant 0 : i32
    %c0_i32_1 = arith.constant 0 : i32
    return %c0_i32, %c0_i32_0 : i32, i32
  }
  func.func @transform_10(%arg0: i32) -> (i32, i32) {
    %c0_i32 = arith.constant 0 : i32
    %c0_i32_0 = arith.constant 0 : i32
    return %arg0, %c0_i32 : i32, i32
  }
}

</mosaic_0001>

<llo_original>
// kernel: tpu_custom_call.1
$region0: #{tpu_custom_call.1}
  #allocation0 [shape = 'u32[]', space=smem, size = 0x4, offset = 0x4, fixed_abs, tag = 'smem constant byte address 0x4 - core index']
  #allocation1 [shape = 'u32[72,128]{1,0:T(1,128)}', space=vmem, size = 0x9000, scoped, tag = 'internal scratch']
  #allocation2 [shape = 'f32[1,1]{1,0:T(1,128)S(1)}', space=vmem, size = 0x200, scoped, tag = 'scoped memory for tpu_custom_call.1']
  #allocation3 [shape = 'f32[1,1]{1,0:T(1,128)S(1)}', space=vmem, size = 0x200, scoped, tag = 'scoped memory for tpu_custom_call.1']
  %s0 = inlined_call_operand.<no memory space> [shape: f32[1,1], index: 0, kind: input, shape index: {}]
  %s1 = inlined_call_operand.<no memory space> [shape: f32[1,1], index: 1, kind: input, shape index: {}]
  %s2 = inlined_call_operand.vmem [shape: f32[16,2], index: 2, kind: input, shape index: {}]
  %s3 = inlined_call_operand.vmem [shape: f32[2,128], index: 3, kind: input, shape index: {}]
  %s4 = inlined_call_operand.vmem [shape: f32[1,128], index: 4, kind: input, shape index: {}]
  %s5 = inlined_call_operand.hbm [shape: f32[128,128], index: 5, kind: input, shape index: {}]
  %s6 = inlined_call_operand.vmem [shape: f32[1,128], index: 6, kind: input, shape index: {}]
  %s7 = inlined_call_operand.hbm [shape: f32[128,128], index: 7, kind: input, shape index: {}]
  %s8 = inlined_call_operand.vmem [shape: f32[1,128], index: 8, kind: input, shape index: {}]
  %s9 = inlined_call_operand.vmem [shape: f32[1,128], index: 9, kind: input, shape index: {}]
  %s10 = inlined_call_operand.hbm [shape: f32[16,128], index: 10, kind: output, shape index: {}]
  %s11 = sld [smem:[#allocation0]]
  $region58: #{tpu_custom_call.1} parent=0
    _
  %s13 = ssub.s32 1, %s11
  %s14 = scalar_select 0, %s13, %s11
  %v15 = vstv %s0
  %16 = vst [vmem:[#allocation2] sm:$0x1] %v15
  %v17 = vstv %s1
  %18 = vst [vmem:[#allocation3] sm:$0x1] %v17
  $region1: #{tpu_custom_call.1} parent=0
    #allocation4 [shape = 'u8[65536]{0}', space=vmem, size = 0x10000, scoped, tag = 'input window, operand 5, single buffered']
    #allocation5 [shape = 's32[1]{0}', space=sflag, size = 0x4, scoped, tag = 'scoped memory for tpu_custom_call.1']
    #allocation6 [shape = 's32[1]{0}', space=sflag, size = 0x4, scoped, tag = 'scoped memory for tpu_custom_call.1']
    #allocation7 [shape = 'u8[65536]{0}', space=vmem, size = 0x10000, scoped, tag = 'input window, operand 7, single buffered']
    #allocation8 [shape = 's32[1]{0}', space=sflag, size = 0x4, scoped, tag = 'scoped memory for tpu_custom_call.1']
    #allocation9 [shape = 'u8[8192]{0}', space=vmem, size = 0x2000, scoped, tag = 'output window, operand 0, single buffered']
    %19 = vsyncpa [#allocation5], 0
    %20 = vsyncpa [#allocation8], 0
    %21 = vsyncpa [#allocation6], 0
    // Predicated region
    $region2: #{tpu_custom_call.1} parent=1 // pred_check
      _
    $region3: #{tpu_custom_call.1} parent=1 // pred_check_branch
      %23 = sbr.rel (0) target = $region5
    $region4: #{tpu_custom_call.1} parent=1 // pred_region
      _
    $region5: #{tpu_custom_call.1} parent=1 // pred_fallthru
      _
    // Predicated region
    $region6: #{tpu_custom_call.1} parent=1 // pred_check
      _
    $region7: #{tpu_custom_call.1} parent=1 // pred_check_branch
      %25 = sbr.rel (0) target = $region9
    $region8: #{tpu_custom_call.1} parent=1 // pred_region
      _
    $region9: #{tpu_custom_call.1} parent=1 // pred_fallthru
      _
    // Predicated region
    $region10: #{tpu_custom_call.1} parent=1 // pred_check
      _
    $region11: #{tpu_custom_call.1} parent=1 // pred_check_branch
      %27 = sbr.rel (0) target = $region13
    $region12: #{tpu_custom_call.1} parent=1 // pred_region
      _
    $region13: #{tpu_custom_call.1} parent=1 // pred_fallthru
      _
    // Predicated region
    $region14: #{tpu_custom_call.1} parent=1 // pred_check
      _
    $region15: #{tpu_custom_call.1} parent=1 // pred_check_branch
      %29 = sbr.rel (0) target = $region17
    $region16: #{tpu_custom_call.1} parent=1 // pred_region
      _
    $region17: #{tpu_custom_call.1} parent=1 // pred_fallthru
      _
    // Predicated region
    $region18: #{tpu_custom_call.1} parent=1 // pred_check
      _
    $region19: #{tpu_custom_call.1} parent=1 // pred_check_branch
      %31 = sbr.rel (0) target = $region21
    $region20: #{tpu_custom_call.1} parent=1 // pred_region
      _
    $region21: #{tpu_custom_call.1} parent=1 // pred_fallthru
      _
    // Predicated region
    $region22: #{tpu_custom_call.1} parent=1 // pred_check
      _
    $region23: #{tpu_custom_call.1} parent=1 // pred_check_branch
      %33 = sbr.rel (0) target = $region25
    $region24: #{tpu_custom_call.1} parent=1 // pred_region
      %35 = vsyncadd [#allocation5], 0
      %s36 = sshll.u32 %s5, 4
      %s37 = int_to_ptr.hbm [resolvable:$true] %s36
      %s38 = sshll.u32 [#allocation4], 4
      %s39 = int_to_ptr.vmem [resolvable:$true] %s38
      %44 = dma.hbm_to_vmem [thread:$0]  %s37, 2048, %s39, [#allocation5], 128, 128, 8
    $region25: #{tpu_custom_call.1} parent=1 // pred_fallthru
      _
    // Predicated region
    $region26: #{tpu_custom_call.1} parent=1 // pred_check
      _
    $region27: #{tpu_custom_call.1} parent=1 // pred_check_branch
      %46 = sbr.rel (0) target = $region29
    $region28: #{tpu_custom_call.1} parent=1 // pred_region
      _
    $region29: #{tpu_custom_call.1} parent=1 // pred_fallthru
      _
    // Predicated region
    $region30: #{tpu_custom_call.1} parent=1 // pred_check
      _
    $region31: #{tpu_custom_call.1} parent=1 // pred_check_branch
      %48 = sbr.rel (0) target = $region33
    $region32: #{tpu_custom_call.1} parent=1 // pred_region
      %50 = vsyncadd [#allocation8], 0
      %s51 = sshll.u32 %s7, 4
      %s52 = int_to_ptr.hbm [resolvable:$true] %s51
      %s53 = sshll.u32 [#allocation7], 4
      %s54 = int_to_ptr.vmem [resolvable:$true] %s53
      %59 = dma.hbm_to_vmem [thread:$0]  %s52, 2048, %s54, [#allocation8], 128, 128, 8
    $region33: #{tpu_custom_call.1} parent=1 // pred_fallthru
      _
    // Predicated region
    $region34: #{tpu_custom_call.1} parent=1 // pred_check
      _
    $region35: #{tpu_custom_call.1} parent=1 // pred_check_branch
      %61 = sbr.rel (0) target = $region37
    $region36: #{tpu_custom_call.1} parent=1 // pred_region
      _
    $region37: #{tpu_custom_call.1} parent=1 // pred_fallthru
      _
    // Predicated region
    $region38: #{tpu_custom_call.1} parent=1 // pred_check
      _
    $region39: #{tpu_custom_call.1} parent=1 // pred_check_branch
      %63 = sbr.rel (0) target = $region41
    $region40: #{tpu_custom_call.1} parent=1 // pred_region
      _
    $region41: #{tpu_custom_call.1} parent=1 // pred_fallthru
      _
    // Predicated region
    $region42: #{tpu_custom_call.1} parent=1 // pred_check
      _
    $region43: #{tpu_custom_call.1} parent=1 // pred_check_branch
      %65 = sbr.rel (0) target = $region45
    $region44: #{tpu_custom_call.1} parent=1 // pred_region
      %67 = dma.done [#allocation5], 2048
    $region45: #{tpu_custom_call.1} parent=1 // pred_fallthru
      _
    // Predicated region
    $region46: #{tpu_custom_call.1} parent=1 // pred_check
      _
    $region47: #{tpu_custom_call.1} parent=1 // pred_check_branch
      %69 = sbr.rel (0) target = $region49
    $region48: #{tpu_custom_call.1} parent=1 // pred_region
      %71 = dma.done [#allocation8], 2048
    $region49: #{tpu_custom_call.1} parent=1 // pred_fallthru
      _
    %v72 = vld [vmem:[%s2] sm:$0xff]
    %v73 = vld [vmem:[%s2 + $0x8] sm:$0xff]
    %v74 = vld [vmem:[#allocation2] sm:$0x1]
    %v75 = vld [vmem:[#allocation3] sm:$0x1]
    %v77 = vperm.slane %v75, 0
    %78 = vset.pattern.permute.xlu0 0
    %79 = vperm.xlu0 %78, %v77
    %v80 = vpop.permute.xlu0 %79
    %v82 = vsub.f32 %v72, %v80
    %v83 = vsub.f32 %v73, %v80
    %v84 = vmul.f32 %v82, 2.0
    %v85 = vmul.f32 %v83, 2.0
    %v86 = vsub.f32 %v74, %v75
    %v88 = vperm.slane %v86, 0
    %89 = vset.pattern.permute.xlu0 0
    %90 = vperm.xlu0 %89, %v88
    %v91 = vpop.permute.xlu0 %90
    %v93 = vrcp.pop %v91
    %v94 = vmul.f32 %v91, %v93
    %v95 = vsub.f32 1.0, %v94
    %v96 = vmul.f32 %v93, %v95
    %v97 = vadd.f32 %v93, %v96
    %vm98 = vweird.f32 %v91
    %vm99 = vweird.f32 %v93
    %vm100 = vmor %vm98, %vm99
    %v101 = vsel %vm100, %v93, %v97
    %v102 = vand.u32 2147483647, %v91
    %vm103 = vcmp.eq.f32.partialorder %v102, 8.507059e+37
    %v104 = vand.u32 %v91, 2147483648
    %v105 = vor.u32 1.1754944e-38, %v104
    %v106 = vsel %vm103, %v105, %v101
    %v107 = vmul.f32 %v84, %v106
    %v108 = vmul.f32 %v85, %v106
    %v109 = vsub.f32 %v107, 1.0
    %v110 = vsub.f32 %v108, 1.0
    %vm111 = vcmp.lt.f32.partialorder %v109, 0.0
    %vm112 = vcmp.lt.f32.partialorder %v110, 0.0
    %v113 = vsel %vm111, 1, 0
    %v114 = vsel %vm112, 1, 0
    %v115 = vcvt.s32.f32 %v113
    %v116 = vcvt.s32.f32 %v114
    %v117 = vsub.f32 1.0, %v115
    %v118 = vsub.f32 1.0, %v116
    %v119 = vadd.f32 %v109, 1.0
    %v120 = vadd.f32 %v110, 1.0
    %v121 = vadd.f32 %v119, 0.01
    %v122 = vadd.f32 %v120, 0.01
    %v123 = vmul.f32 %v121, %v115
    %v124 = vmul.f32 %v122, %v116
    %v125 = vadd.f32 %v123, %v117
    %v126 = vadd.f32 %v124, %v118
    %v127 = vlog2.pop %v125
    %v128 = vmul.f32 %v127, 0.6931472
    %v129 = vlog2.pop %v126
    %v130 = vmul.f32 %v129, 0.6931472
    %v131 = vsub.f32 1.0, %v109
    %v132 = vsub.f32 1.0, %v110
    %v133 = vadd.f32 %v131, 0.01
    %v134 = vadd.f32 %v132, 0.01
    %v135 = vmul.f32 %v133, %v117
    %v136 = vmul.f32 %v134, %v118
    %v137 = vadd.f32 %v135, %v115
    %v138 = vadd.f32 %v136, %v116
    %v139 = vlog2.pop %v137
    %v140 = vmul.f32 %v139, 0.6931472
    %v141 = vlog2.pop %v138
    %v142 = vmul.f32 %v141, 0.6931472
    %v143 = vsub.f32 %v128, %v140
    %v144 = vsub.f32 %v130, %v142
    %v145 = vld [vmem:[%s3] sm:$0x3]
    %v146 = vld [vmem:[%s4] sm:$0x1]
    %v148 = vperm.slane %v146, 0
    %vm150 = vcmask 15360
    %v152 = vsel %vm150, %v143, 0
    %v155 = vsel %vm150, %v144, 0
    %vm157 = vcmask 1041408
    %v159 = vsel %vm157, %v145, 0
    %161 = vmatpush.msra.mxu0 0.0
    %162 = vmatpush.msra.mxu0 0.0
    %163 = vmatpush.msra.mxu0 0.0
    %164 = vmatpush.msra.mxu0 0.0
    %165 = vmatpush.msra.mxu0 0.0
    %166 = vmatpush.msra.mxu0 0.0
    %167 = vmatpush.msra.mxu0 0.0
    %168 = vmatpush.msra.mxu0 0.0
    %169 = vmatpush.msra.mxu0 0.0
    %170 = vmatpush.msra.mxu0 0.0
    %171 = vmatpush.msra.mxu0 0.0
    %172 = vmatpush.msra.mxu0 0.0
    %173 = vmatpush.msra.mxu0 0.0
    %174 = vmatpush.msra.mxu0 0.0
    %175 = vmatpush.msra.mxu0 0.0
    %176 = vmatpush.msra.mxu0 %v159
    %177 = vmatmul.f32.gmra.mxu0 %v152
    %v178 = vpop.f32.mrf.mxu0
    %v179 = vadd.f32 %v148, %v178
    %180 = vmatmul.f32.gmra.mxu0 %v155
    %v181 = vpop.f32.mrf.mxu0
    %v182 = vadd.f32 %v148, %v181
    %183 = vdwg.mxu0
    %vm184 = vcmp.gt.f32.partialorder %v179, 0.0
    %vm185 = vcmp.gt.f32.partialorder %v182, 0.0
    %v186 = vmul.f32 %v179, 1.442695
    %v187 = vpow.pop %v186
    %v188 = vmul.f32 %v182, 1.442695
    %v189 = vpow.pop %v188
    %v190 = vsub.f32 %v187, 1.0
    %v191 = vsub.f32 %v189, 1.0
    %v192 = vmul.f32 %v190, 1.6732632
    %v193 = vmul.f32 %v191, 1.6732632
    %v194 = vsel %vm184, %v179, %v192
    %v195 = vsel %vm185, %v182, %v193
    %v196 = vmul.f32 %v194, 1.050701
    %v197 = vmul.f32 %v195, 1.050701
    %v198 = vld [vmem:[#allocation4] sm:$0xff]
    %v199 = vld [vmem:[#allocation4 + $0x8] sm:$0xff]
    %v200 = vld [vmem:[#allocation4 + $0x10] sm:$0xff]
    %v201 = vld [vmem:[#allocation4 + $0x18] sm:$0xff]
    %v202 = vld [vmem:[#allocation4 + $0x20] sm:$0xff]
    %v203 = vld [vmem:[#allocation4 + $0x28] sm:$0xff]
    %v204 = vld [vmem:[#allocation4 + $0x30] sm:$0xff]
    %v205 = vld [vmem:[#allocation4 + $0x38] sm:$0xff]
    %v206 = vld [vmem:[#allocation4 + $0x40] sm:$0xff]
    %v207 = vld [vmem:[#allocation4 + $0x48] sm:$0xff]
    %v208 = vld [vmem:[#allocation4 + $0x50] sm:$0xff]
    %v209 = vld [vmem:[#allocation4 + $0x58] sm:$0xff]
    %v210 = vld [vmem:[#allocation4 + $0x60] sm:$0xff]
    %v211 = vld [vmem:[#allocation4 + $0x68] sm:$0xff]
    %v212 = vld [vmem:[#allocation4 + $0x70] sm:$0xff]
    %v213 = vld [vmem:[#allocation4 + $0x78] sm:$0xff]
    %v214 = vld [vmem:[%s6] sm:$0x1]
    %v216 = vperm.slane %v214, 0
    %218 = vmatpush.msra.mxu0 %v213
    %219 = vmatpush.msra.mxu0 %v212
    %220 = vmatpush.msra.mxu0 %v211
    %221 = vmatpush.msra.mxu0 %v210
    %222 = vmatpush.msra.mxu0 %v209
    %223 = vmatpush.msra.mxu0 %v208
    %224 = vmatpush.msra.mxu0 %v207
    %225 = vmatpush.msra.mxu0 %v206
    %226 = vmatpush.msra.mxu0 %v205
    %227 = vmatpush.msra.mxu0 %v204
    %228 = vmatpush.msra.mxu0 %v203
    %229 = vmatpush.msra.mxu0 %v202
    %230 = vmatpush.msra.mxu0 %v201
    %231 = vmatpush.msra.mxu0 %v200
    %232 = vmatpush.msra.mxu0 %v199
    %233 = vmatpush.msra.mxu0 %v198
    %234 = vmatmul.f32.gmra.mxu0 %v196
    %v235 = vpop.f32.mrf.mxu0
    %v236 = vadd.f32 %v216, %v235
    %237 = vmatmul.f32.gmra.mxu0 %v197
    %v238 = vpop.f32.mrf.mxu0
    %v239 = vadd.f32 %v216, %v238
    %240 = vdwg.mxu0
    %vm241 = vcmp.gt.f32.partialorder %v236, 0.0
    %vm242 = vcmp.gt.f32.partialorder %v239, 0.0
    %v243 = vmul.f32 %v236, 1.442695
    %v244 = vpow.pop %v243
    %v245 = vmul.f32 %v239, 1.442695
    %v246 = vpow.pop %v245
    %v247 = vsub.f32 %v244, 1.0
    %v248 = vsub.f32 %v246, 1.0
    %v249 = vmul.f32 %v247, 1.6732632
    %v250 = vmul.f32 %v248, 1.6732632
    %v251 = vsel %vm241, %v236, %v249
    %v252 = vsel %vm242, %v239, %v250
    %v253 = vmul.f32 %v251, 1.050701
    %v254 = vmul.f32 %v252, 1.050701
    %v255 = vld [vmem:[#allocation7] sm:$0xff]
    %v256 = vld [vmem:[#allocation7 + $0x8] sm:$0xff]
    %v257 = vld [vmem:[#allocation7 + $0x10] sm:$0xff]
    %v258 = vld [vmem:[#allocation7 + $0x18] sm:$0xff]
    %v259 = vld [vmem:[#allocation7 + $0x20] sm:$0xff]
    %v260 = vld [vmem:[#allocation7 + $0x28] sm:$0xff]
    %v261 = vld [vmem:[#allocation7 + $0x30] sm:$0xff]
    %v262 = vld [vmem:[#allocation7 + $0x38] sm:$0xff]
    %v263 = vld [vmem:[#allocation7 + $0x40] sm:$0xff]
    %v264 = vld [vmem:[#allocation7 + $0x48] sm:$0xff]
    %v265 = vld [vmem:[#allocation7 + $0x50] sm:$0xff]
    %v266 = vld [vmem:[#allocation7 + $0x58] sm:$0xff]
    %v267 = vld [vmem:[#allocation7 + $0x60] sm:$0xff]
    %v268 = vld [vmem:[#allocation7 + $0x68] sm:$0xff]
    %v269 = vld [vmem:[#allocation7 + $0x70] sm:$0xff]
    %v270 = vld [vmem:[#allocation7 + $0x78] sm:$0xff]
    %v271 = vld [vmem:[%s8] sm:$0x1]
    %v273 = vperm.slane %v271, 0
    %275 = vmatpush.msra.mxu0 %v270
    %276 = vmatpush.msra.mxu0 %v269
    %277 = vmatpush.msra.mxu0 %v268
    %278 = vmatpush.msra.mxu0 %v267
    %279 = vmatpush.msra.mxu0 %v266
    %280 = vmatpush.msra.mxu0 %v265
    %281 = vmatpush.msra.mxu0 %v264
    %282 = vmatpush.msra.mxu0 %v263
    %283 = vmatpush.msra.mxu0 %v262
    %284 = vmatpush.msra.mxu0 %v261
    %285 = vmatpush.msra.mxu0 %v260
    %286 = vmatpush.msra.mxu0 %v259
    %287 = vmatpush.msra.mxu0 %v258
    %288 = vmatpush.msra.mxu0 %v257
    %289 = vmatpush.msra.mxu0 %v256
    %290 = vmatpush.msra.mxu0 %v255
    %291 = vmatmul.f32.gmra.mxu0 %v253
    %v292 = vpop.f32.mrf.mxu0
    %v293 = vadd.f32 %v273, %v292
    %294 = vmatmul.f32.gmra.mxu0 %v254
    %v295 = vpop.f32.mrf.mxu0
    %v296 = vadd.f32 %v273, %v295
    %297 = vdwg.mxu0
    %v298 = vtanh.pop %v293
    %v299 = vtanh.pop %v296
    %v300 = vld [vmem:[%s9] sm:$0x1]
    %v302 = vperm.slane %v300, 0
    %v304 = vmul.f32 %v298, %v302
    %v305 = vmul.f32 %v299, %v302
    %306 = vst [vmem:[#allocation9] sm:$0xff] %v304
    %307 = vst [vmem:[#allocation9 + $0x8] sm:$0xff] %v305
    // Predicated region
    $region50: #{tpu_custom_call.1} parent=1 // pred_check
      _
    $region51: #{tpu_custom_call.1} parent=1 // pred_check_branch
      %309 = sbr.rel (0) target = $region53
    $region52: #{tpu_custom_call.1} parent=1 // pred_region
      %311 = vsyncadd [#allocation6], 0
      %s312 = sshll.u32 [#allocation9], 4
      %s313 = int_to_ptr.vmem [resolvable:$true] %s312
      %s314 = sshll.u32 %s10, 4
      %s315 = int_to_ptr.hbm [resolvable:$true] %s314
      %320 = dma.vmem_to_hbm [thread:$0]  %s313, 256, %s315, [#allocation6], 128, 128, 8
    $region53: #{tpu_custom_call.1} parent=1 // pred_fallthru
      _
    // Predicated region
    $region54: #{tpu_custom_call.1} parent=1 // pred_check
      _
    $region55: #{tpu_custom_call.1} parent=1 // pred_check_branch
      %322 = sbr.rel (0) target = $region57
    $region56: #{tpu_custom_call.1} parent=1 // pred_region
      %324 = dma.done [#allocation6], 256
    $region57: #{tpu_custom_call.1} parent=1 // pred_fallthru
      _
    %325 = vsyncpa [#allocation5], 1
    %326 = vsyncpa [#allocation8], 1
    %327 = vsyncpa [#allocation6], 1

</llo_original>
